<compile_context>
chip_gen: v6e
topology: v6e:2x2x1
jax: 0.10.0
libtpu: 0.0.40
codegen_flags: <defaults>
</compile_context>

<pallas_src>
import jax
import jax.numpy as jnp
from jax.experimental import pallas as pl
from jax.experimental.pallas import tpu as pltpu

NUM_INPUT = 20 * 20     # 400
HIDDEN = 32
NUM_CLASSES = 26
OUT_PAD = 128           # lane-dense padded output width
DEFAULT_TB = 1024       # portable batch tile (rows)


def _round_up(n, m):
    return ((n + m - 1) // m) * m


def mlp_kernel(x_ref, w1_ref, b1_ref, w2_ref, b2_ref, out_ref):
    # x tile: (TB, 400) bf16; weights bf16 (VMEM-resident); biases f32.
    x = x_ref[...]
    h = jnp.dot(x, w1_ref[...], preferred_element_type=jnp.float32)   # (TB, 32) f32
    h = jnp.maximum(h + b1_ref[...], 0.0)
    o = jnp.dot(h.astype(jnp.bfloat16), w2_ref[...],
                preferred_element_type=jnp.float32)                   # (TB, 128) f32
    o = jnp.maximum(o + b2_ref[...], 0.0)
    out_ref[...] = o                                                  # unmasked lane-dense store


def prepare_params(w1, b1, w2, b2):
    """One-time parameter prep: bf16 weights, f32 biases, lane-dense padding."""
    w1b = w1.astype(jnp.bfloat16)                                     # (400, 32)
    b1f = b1.reshape(1, HIDDEN).astype(jnp.float32)                   # (1, 32)
    w2p = jnp.zeros((HIDDEN, OUT_PAD), jnp.bfloat16)
    w2p = w2p.at[:, :NUM_CLASSES].set(w2.astype(jnp.bfloat16))        # (32, 128)
    b2p = jnp.zeros((1, OUT_PAD), jnp.float32)
    b2p = b2p.at[:, :NUM_CLASSES].set(b2.astype(jnp.float32))         # (1, 128)
    return w1b, b1f, w2p, b2p


def fully_connected_forward(x, params, *, tb=None):
    """x: any shape reshapable to (-1, 400); returns (B, 26) float32."""
    w1b, b1f, w2p, b2p = params
    x2d = jnp.reshape(x, (-1, NUM_INPUT)).astype(jnp.bfloat16)
    B = x2d.shape[0]

    # Batch tile: multiple of 8 sublanes, no bigger than needed for small B.
    if tb is None:
        tb = min(DEFAULT_TB, _round_up(B, 8))
    tb = max(8, _round_up(tb, 8))
    Bp = _round_up(B, tb)
    if Bp != B:
        x2d = jnp.pad(x2d, ((0, Bp - B), (0, 0)))   # zero-pad ragged batch tail

    grid = (pl.cdiv(Bp, tb),)
    out = pl.pallas_call(
        mlp_kernel,
        out_shape=jax.ShapeDtypeStruct((Bp, OUT_PAD), jnp.float32),
        grid=grid,
        in_specs=[
            pl.BlockSpec((tb, NUM_INPUT), lambda i: (i, 0)),        # streamed x tiles
            pl.BlockSpec((NUM_INPUT, HIDDEN), lambda i: (0, 0)),    # VMEM-resident W1
            pl.BlockSpec((1, HIDDEN), lambda i: (0, 0)),            # VMEM-resident b1
            pl.BlockSpec((HIDDEN, OUT_PAD), lambda i: (0, 0)),      # VMEM-resident W2 (padded)
            pl.BlockSpec((1, OUT_PAD), lambda i: (0, 0)),           # VMEM-resident b2 (padded)
        ],
        out_specs=pl.BlockSpec((tb, OUT_PAD), lambda i: (i, 0)),
        compiler_params=pltpu.CompilerParams(
            dimension_semantics=("parallel",),
        ),
    )(x2d, w1b, b1f, w2p, b2p)

    return out[:B, :NUM_CLASSES]


def init_params(key):
    # Deterministic init mimicking torch.nn.Linear's U(-1/sqrt(fan_in), 1/sqrt(fan_in)).
    k1, k2, k3, k4 = jax.random.split(key, 4)
    lim1 = 1.0 / jnp.sqrt(float(NUM_INPUT))
    lim2 = 1.0 / jnp.sqrt(float(HIDDEN))
    w1 = jax.random.uniform(k1, (NUM_INPUT, HIDDEN), jnp.float32, -lim1, lim1)
    b1 = jax.random.uniform(k2, (HIDDEN,), jnp.float32, -lim1, lim1)
    w2 = jax.random.uniform(k3, (HIDDEN, NUM_CLASSES), jnp.float32, -lim2, lim2)
    b2 = jax.random.uniform(k4, (NUM_CLASSES,), jnp.float32, -lim2, lim2)
    return w1, b1, w2, b2


if __name__ == "__main__":
    key = jax.random.PRNGKey(0)
    kx, kp = jax.random.split(key)
    # Small batch of 20x20 "images" (as the 400-feature view implies).
    # NOTE: at B=8 the pallas_call fixed overhead dominates; this is a
    # correctness check, not a benchmark (tune at B in the thousands).
    x = jax.random.normal(kx, (8, 20, 20), jnp.float32)
    w1, b1, w2, b2 = init_params(kp)

    params = prepare_params(w1, b1, w2, b2)   # one-time prep (hoisted casts)
    out = fully_connected_forward(x, params)
    out = jax.block_until_ready(out)
    assert out.shape == (8, NUM_CLASSES)

    # Reference 1: same bf16-input / f32-accumulate path as the kernel (tight).
    xr = x.reshape(-1, NUM_INPUT)
    h_bf = jnp.maximum(
        jnp.dot(xr.astype(jnp.bfloat16), w1.astype(jnp.bfloat16),
                preferred_element_type=jnp.float32) + b1, 0.0)
    ref_bf = jnp.maximum(
        jnp.dot(h_bf.astype(jnp.bfloat16), w2.astype(jnp.bfloat16),
                preferred_element_type=jnp.float32) + b2, 0.0)
    assert jnp.allclose(out, ref_bf, atol=1e-3, rtol=1e-3)

    # Reference 2: pure f32 PyTorch semantics (loose, bf16-stream tolerance).
    ref_f32 = jnp.maximum(jnp.maximum(xr @ w1 + b1, 0.0) @ w2 + b2, 0.0)
    assert jnp.allclose(out, ref_f32, atol=1e-1, rtol=1e-1)

    print("KERNEL_OK")
</pallas_src>

<mosaic_0001>
module attributes {stable_mosaic.version = 11 : i64} {
  func.func @mlp_kernel(%arg0: i32, %arg1: memref<8x400xbf16, #tpu.memory_space<vmem>>, %arg2: memref<400x32xbf16, #tpu.memory_space<vmem>>, %arg3: memref<1x32xf32, #tpu.memory_space<vmem>>, %arg4: memref<32x128xbf16, #tpu.memory_space<vmem>>, %arg5: memref<1x128xf32, #tpu.memory_space<vmem>>, %arg6: memref<8x128xf32, #tpu.memory_space<vmem>>) attributes {dimension_semantics = [#tpu.dimension_semantics<parallel>], iteration_bounds = array<i64: 1>, scalar_prefetch = 0 : i64, scratch_operands = 0 : i64, tpu.core_type = #tpu.core_type<tc>, window_params = [{transform_indices = @transform_0, window_bounds = array<i64: 8, 400>}, {pipeline_mode = #tpu.pipeline_mode<synchronous>, transform_indices = @transform_1, window_bounds = array<i64: 400, 32>}, {pipeline_mode = #tpu.pipeline_mode<synchronous>, transform_indices = @transform_2, window_bounds = array<i64: 1, 32>}, {pipeline_mode = #tpu.pipeline_mode<synchronous>, transform_indices = @transform_3, window_bounds = array<i64: 32, 128>}, {pipeline_mode = #tpu.pipeline_mode<synchronous>, transform_indices = @transform_4, window_bounds = array<i64: 1, 128>}, {transform_indices = @transform_5, window_bounds = array<i64: 8, 128>}]} {
    %c0 = arith.constant 0 : index
    %c0_0 = arith.constant 0 : index
    %0 = vector.load %arg1[%c0, %c0_0] : memref<8x400xbf16, #tpu.memory_space<vmem>>, vector<8x400xbf16>
    %c0_1 = arith.constant 0 : index
    %c0_2 = arith.constant 0 : index
    %1 = vector.load %arg2[%c0_1, %c0_2] : memref<400x32xbf16, #tpu.memory_space<vmem>>, vector<400x32xbf16>
    %cst = arith.constant dense<0.000000e+00> : vector<8x32xf32>
    %2 = tpu.matmul %0, %1, %cst {dimension_numbers = #tpu.dot_dimension_numbers<[1], [0], [0], [1], [0, 0, 1, 1], [], []>} : vector<8x400xbf16>, vector<400x32xbf16>, vector<8x32xf32> -> vector<8x32xf32>
    %c0_3 = arith.constant 0 : index
    %c0_4 = arith.constant 0 : index
    %3 = vector.load %arg3[%c0_3, %c0_4] : memref<1x32xf32, #tpu.memory_space<vmem>>, vector<1x32xf32>
    %4 = vector.broadcast %3 : vector<1x32xf32> to vector<8x32xf32>
    %5 = arith.addf %2, %4 : vector<8x32xf32>
    %cst_5 = arith.constant 0.000000e+00 : f32
    %6 = vector.broadcast %cst_5 : f32 to vector<8x32xf32>
    %7 = arith.maximumf %5, %6 : vector<8x32xf32>
    %8 = arith.truncf %7 : vector<8x32xf32> to vector<8x32xbf16>
    %c0_6 = arith.constant 0 : index
    %c0_7 = arith.constant 0 : index
    %9 = vector.load %arg4[%c0_6, %c0_7] : memref<32x128xbf16, #tpu.memory_space<vmem>>, vector<32x128xbf16>
    %cst_8 = arith.constant dense<0.000000e+00> : vector<8x128xf32>
    %10 = tpu.matmul %8, %9, %cst_8 {dimension_numbers = #tpu.dot_dimension_numbers<[1], [0], [0], [1], [0, 0, 1, 1], [], []>} : vector<8x32xbf16>, vector<32x128xbf16>, vector<8x128xf32> -> vector<8x128xf32>
    %c0_9 = arith.constant 0 : index
    %c0_10 = arith.constant 0 : index
    %11 = vector.load %arg5[%c0_9, %c0_10] : memref<1x128xf32, #tpu.memory_space<vmem>>, vector<1x128xf32>
    %12 = vector.broadcast %11 : vector<1x128xf32> to vector<8x128xf32>
    %13 = arith.addf %10, %12 : vector<8x128xf32>
    %cst_11 = arith.constant 0.000000e+00 : f32
    %14 = vector.broadcast %cst_11 : f32 to vector<8x128xf32>
    %15 = arith.maximumf %13, %14 : vector<8x128xf32>
    %c0_12 = arith.constant 0 : index
    %c0_13 = arith.constant 0 : index
    %16 = vector.load %arg6[%c0_12, %c0_13] : memref<8x128xf32, #tpu.memory_space<vmem>>, vector<8x128xf32>
    tpu.vector_store %arg6[%c0_12, %c0_13], %15 {strides = array<i32>} : memref<8x128xf32, #tpu.memory_space<vmem>>, vector<8x128xf32>,
    return
  }
  func.func @transform_0(%arg0: i32) -> (i32, i32) {
    %c0_i32 = arith.constant 0 : i32
    %c0_i32_0 = arith.constant 0 : i32
    return %arg0, %c0_i32 : i32, i32
  }
  func.func @transform_1(%arg0: i32) -> (i32, i32) {
    %c0_i32 = arith.constant 0 : i32
    %c0_i32_0 = arith.constant 0 : i32
    %c0_i32_1 = arith.constant 0 : i32
    return %c0_i32, %c0_i32_0 : i32, i32
  }
  func.func @transform_2(%arg0: i32) -> (i32, i32) {
    %c0_i32 = arith.constant 0 : i32
    %c0_i32_0 = arith.constant 0 : i32
    %c0_i32_1 = arith.constant 0 : i32
    return %c0_i32, %c0_i32_0 : i32, i32
  }
  func.func @transform_3(%arg0: i32) -> (i32, i32) {
    %c0_i32 = arith.constant 0 : i32
    %c0_i32_0 = arith.constant 0 : i32
    %c0_i32_1 = arith.constant 0 : i32
    return %c0_i32, %c0_i32_0 : i32, i32
  }
  func.func @transform_4(%arg0: i32) -> (i32, i32) {
    %c0_i32 = arith.constant 0 : i32
    %c0_i32_0 = arith.constant 0 : i32
    %c0_i32_1 = arith.constant 0 : i32
    return %c0_i32, %c0_i32_0 : i32, i32
  }
  func.func @transform_5(%arg0: i32) -> (i32, i32) {
    %c0_i32 = arith.constant 0 : i32
    %c0_i32_0 = arith.constant 0 : i32
    return %arg0, %c0_i32 : i32, i32
  }
}

</mosaic_0001>

<llo_original>
// kernel: tpu_custom_call.1
$region0: #{tpu_custom_call.1}
  #allocation0 [shape = 'u32[]', space=smem, size = 0x4, offset = 0x4, fixed_abs, tag = 'smem constant byte address 0x4 - core index']
  #allocation1 [shape = 'u32[144,128]{1,0:T(1,128)}', space=vmem, size = 0x12000, scoped, tag = 'internal scratch']
  %s0 = inlined_call_operand.vmem [shape: bf16[8,400], index: 0, kind: input, shape index: {}]
  %s1 = inlined_call_operand.vmem [shape: bf16[400,32], index: 1, kind: input, shape index: {}]
  %s2 = inlined_call_operand.vmem [shape: f32[1,32], index: 2, kind: input, shape index: {}]
  %s3 = inlined_call_operand.vmem [shape: bf16[32,128], index: 3, kind: input, shape index: {}]
  %s4 = inlined_call_operand.vmem [shape: f32[1,128], index: 4, kind: input, shape index: {}]
  %s5 = inlined_call_operand.hbm [shape: f32[8,128], index: 5, kind: output, shape index: {}]
  %s6 = sld [smem:[#allocation0]]
  $region30: #{tpu_custom_call.1} parent=0
    _
  %s8 = ssub.s32 1, %s6
  %s9 = scalar_select 0, %s8, %s6
  $region1: #{tpu_custom_call.1} parent=0
    #allocation2 [shape = 'u8[4096]{0}', space=vmem, size = 0x1000, scoped, tag = 'output window, operand 0, single buffered']
    #allocation3 [shape = 's32[1]{0}', space=sflag, size = 0x4, scoped, tag = 'scoped memory for tpu_custom_call.1']
    %10 = vsyncpa [#allocation3], 0
    // Predicated region
    $region2: #{tpu_custom_call.1} parent=1 // pred_check
      _
    $region3: #{tpu_custom_call.1} parent=1 // pred_check_branch
      %12 = sbr.rel (0) target = $region5
    $region4: #{tpu_custom_call.1} parent=1 // pred_region
      _
    $region5: #{tpu_custom_call.1} parent=1 // pred_fallthru
      _
    // Predicated region
    $region6: #{tpu_custom_call.1} parent=1 // pred_check
      _
    $region7: #{tpu_custom_call.1} parent=1 // pred_check_branch
      %14 = sbr.rel (0) target = $region9
    $region8: #{tpu_custom_call.1} parent=1 // pred_region
      _
    $region9: #{tpu_custom_call.1} parent=1 // pred_fallthru
      _
    // Predicated region
    $region10: #{tpu_custom_call.1} parent=1 // pred_check
      _
    $region11: #{tpu_custom_call.1} parent=1 // pred_check_branch
      %16 = sbr.rel (0) target = $region13
    $region12: #{tpu_custom_call.1} parent=1 // pred_region
      _
    $region13: #{tpu_custom_call.1} parent=1 // pred_fallthru
      _
    // Predicated region
    $region14: #{tpu_custom_call.1} parent=1 // pred_check
      _
    $region15: #{tpu_custom_call.1} parent=1 // pred_check_branch
      %18 = sbr.rel (0) target = $region17
    $region16: #{tpu_custom_call.1} parent=1 // pred_region
      _
    $region17: #{tpu_custom_call.1} parent=1 // pred_fallthru
      _
    // Predicated region
    $region18: #{tpu_custom_call.1} parent=1 // pred_check
      _
    $region19: #{tpu_custom_call.1} parent=1 // pred_check_branch
      %20 = sbr.rel (0) target = $region21
    $region20: #{tpu_custom_call.1} parent=1 // pred_region
      _
    $region21: #{tpu_custom_call.1} parent=1 // pred_fallthru
      _
    %v22 = vld [vmem:[%s0] sm:$0xff]
    %v23 = vld [vmem:[%s0 + $0x8] sm:$0xff]
    %v24 = vld [vmem:[%s1] sm:$0xf]
    %v25 = vld [vmem:[%s1 + $0x4] sm:$0xf]
    %v26 = vld [vmem:[%s1 + $0x8] sm:$0xf]
    %v27 = vld [vmem:[%s1 + $0xc] sm:$0xf]
    %v28 = vld [vmem:[%s1 + $0x10] sm:$0xf]
    %v29 = vld [vmem:[%s1 + $0x14] sm:$0xf]
    %v30 = vld [vmem:[%s1 + $0x18] sm:$0xf]
    %v31 = vld [vmem:[%s1 + $0x1c] sm:$0xf]
    %v32 = vld [vmem:[%s1 + $0x20] sm:$0xf]
    %v33 = vld [vmem:[%s1 + $0x24] sm:$0xf]
    %v34 = vld [vmem:[%s1 + $0x28] sm:$0xf]
    %v35 = vld [vmem:[%s1 + $0x2c] sm:$0xf]
    %v36 = vld [vmem:[%s1 + $0x30] sm:$0xf]
    %v37 = vld [vmem:[%s1 + $0x34] sm:$0xf]
    %v38 = vld [vmem:[%s1 + $0x38] sm:$0xf]
    %v39 = vld [vmem:[%s1 + $0x3c] sm:$0xf]
    %v40 = vld [vmem:[%s1 + $0x40] sm:$0xf]
    %v41 = vld [vmem:[%s1 + $0x44] sm:$0xf]
    %v42 = vld [vmem:[%s1 + $0x48] sm:$0xf]
    %v43 = vld [vmem:[%s1 + $0x4c] sm:$0xf]
    %v44 = vld [vmem:[%s1 + $0x50] sm:$0xf]
    %v45 = vld [vmem:[%s1 + $0x54] sm:$0xf]
    %v46 = vld [vmem:[%s1 + $0x58] sm:$0xf]
    %v47 = vld [vmem:[%s1 + $0x5c] sm:$0xf]
    %v48 = vld [vmem:[%s1 + $0x60] sm:$0xf]
    %v49 = vld [vmem:[%s1 + $0x64] sm:$0xf]
    %v50 = vld [vmem:[%s1 + $0x68] sm:$0xf]
    %v51 = vld [vmem:[%s1 + $0x6c] sm:$0xf]
    %v52 = vld [vmem:[%s1 + $0x70] sm:$0xf]
    %v53 = vld [vmem:[%s1 + $0x74] sm:$0xf]
    %v54 = vld [vmem:[%s1 + $0x78] sm:$0xf]
    %v55 = vld [vmem:[%s1 + $0x7c] sm:$0xf]
    %v56 = vld [vmem:[%s1 + $0x80] sm:$0xf]
    %v57 = vld [vmem:[%s1 + $0x84] sm:$0xf]
    %v58 = vld [vmem:[%s1 + $0x88] sm:$0xf]
    %v59 = vld [vmem:[%s1 + $0x8c] sm:$0xf]
    %v60 = vld [vmem:[%s1 + $0x90] sm:$0xf]
    %v61 = vld [vmem:[%s1 + $0x94] sm:$0xf]
    %v62 = vld [vmem:[%s1 + $0x98] sm:$0xf]
    %v63 = vld [vmem:[%s1 + $0x9c] sm:$0xf]
    %v64 = vld [vmem:[%s1 + $0xa0] sm:$0xf]
    %v65 = vld [vmem:[%s1 + $0xa4] sm:$0xf]
    %v66 = vld [vmem:[%s1 + $0xa8] sm:$0xf]
    %v67 = vld [vmem:[%s1 + $0xac] sm:$0xf]
    %v68 = vld [vmem:[%s1 + $0xb0] sm:$0xf]
    %v69 = vld [vmem:[%s1 + $0xb4] sm:$0xf]
    %v70 = vld [vmem:[%s1 + $0xb8] sm:$0xf]
    %v71 = vld [vmem:[%s1 + $0xbc] sm:$0xf]
    %v72 = vld [vmem:[%s1 + $0xc0] sm:$0xf]
    %v73 = vld [vmem:[%s1 + $0xc4] sm:$0xf]
    %v74 = vld [vmem:[%s2] sm:$0x1]
    %v76 = vlaneseq
    %v77 = vshrl.u32 %v76, 7
    %v78 = vsub.s32 0, %v77
    %v79 = vrot.slane %v74, %v78
    %v83 = vunpack.c.l.b16 %v22
    %v84 = vunpack.c.h.b16 %v22
    %v85 = vunpack.c.l.b16 %v23
    %v86 = vunpack.c.h.b16 %v23
    %v87 = vpack.c.b16 %v83, %v83
    %v88 = vpack.c.b16 %v84, %v84
    %v89 = vpack.c.b16 %v85, %v85
    %v90 = vpack.c.b16 %v86, %v86
    %v144 = vunpack.c.l.b16 %v24
    %v145 = vunpack.c.l.b16 %v25
    %v146 = vunpack.c.l.b16 %v26
    %v147 = vunpack.c.l.b16 %v27
    %v148 = vunpack.c.l.b16 %v28
    %v149 = vunpack.c.l.b16 %v29
    %v150 = vunpack.c.l.b16 %v30
    %v151 = vunpack.c.l.b16 %v31
    %v152 = vunpack.c.l.b16 %v32
    %v153 = vunpack.c.l.b16 %v33
    %v154 = vunpack.c.l.b16 %v34
    %v155 = vunpack.c.l.b16 %v35
    %v156 = vunpack.c.l.b16 %v36
    %v157 = vunpack.c.l.b16 %v37
    %v158 = vunpack.c.l.b16 %v38
    %v159 = vunpack.c.l.b16 %v39
    %v160 = vunpack.c.l.b16 %v40
    %v161 = vunpack.c.l.b16 %v41
    %v162 = vunpack.c.l.b16 %v42
    %v163 = vunpack.c.l.b16 %v43
    %v164 = vunpack.c.l.b16 %v44
    %v165 = vunpack.c.l.b16 %v45
    %v166 = vunpack.c.l.b16 %v46
    %v167 = vunpack.c.l.b16 %v47
    %v168 = vunpack.c.l.b16 %v48
    %v169 = vunpack.c.l.b16 %v49
    %v170 = vunpack.c.l.b16 %v50
    %v171 = vunpack.c.l.b16 %v51
    %v172 = vunpack.c.l.b16 %v52
    %v173 = vunpack.c.l.b16 %v53
    %v174 = vunpack.c.l.b16 %v54
    %v175 = vunpack.c.l.b16 %v55
    %v176 = vunpack.c.l.b16 %v56
    %v177 = vunpack.c.l.b16 %v57
    %v178 = vunpack.c.l.b16 %v58
    %v179 = vunpack.c.l.b16 %v59
    %v180 = vunpack.c.l.b16 %v60
    %v181 = vunpack.c.l.b16 %v61
    %v182 = vunpack.c.l.b16 %v62
    %v183 = vunpack.c.l.b16 %v63
    %v184 = vunpack.c.l.b16 %v64
    %v185 = vunpack.c.l.b16 %v65
    %v186 = vunpack.c.l.b16 %v66
    %v187 = vunpack.c.l.b16 %v67
    %v188 = vunpack.c.l.b16 %v68
    %v189 = vunpack.c.l.b16 %v69
    %v190 = vunpack.c.l.b16 %v70
    %v191 = vunpack.c.l.b16 %v71
    %v192 = vunpack.c.l.b16 %v72
    %v193 = vunpack.c.l.b16 %v73
    %v194 = vpack.c.b16 %v145, %v144
    %v195 = vpack.c.b16 %v147, %v146
    %v196 = vpack.c.b16 %v149, %v148
    %v197 = vpack.c.b16 %v151, %v150
    %v198 = vpack.c.b16 %v153, %v152
    %v199 = vpack.c.b16 %v155, %v154
    %v200 = vpack.c.b16 %v157, %v156
    %v201 = vpack.c.b16 %v159, %v158
    %v202 = vpack.c.b16 %v161, %v160
    %v203 = vpack.c.b16 %v163, %v162
    %v204 = vpack.c.b16 %v165, %v164
    %v205 = vpack.c.b16 %v167, %v166
    %v206 = vpack.c.b16 %v169, %v168
    %v207 = vpack.c.b16 %v171, %v170
    %v208 = vpack.c.b16 %v173, %v172
    %v209 = vpack.c.b16 %v175, %v174
    %v210 = vpack.c.b16 %v177, %v176
    %v211 = vpack.c.b16 %v179, %v178
    %v212 = vpack.c.b16 %v181, %v180
    %v213 = vpack.c.b16 %v183, %v182
    %v214 = vpack.c.b16 %v185, %v184
    %v215 = vpack.c.b16 %v187, %v186
    %v216 = vpack.c.b16 %v189, %v188
    %v217 = vpack.c.b16 %v191, %v190
    %v218 = vpack.c.b16 %v193, %v192
    %vm244 = vcmask 130048
    %v246 = vsel %vm244, %v90, 0
    %248 = vmatprep.subr.bf16.mxu0 0
    %249 = vmatpush1.bf16.msra.mxu0 %v201
    %250 = vmatprep.subr.bf16.mxu0 0
    %251 = vmatpush1.bf16.msra.mxu0 %v200
    %252 = vmatprep.subr.bf16.mxu0 0
    %253 = vmatpush1.bf16.msra.mxu0 %v199
    %254 = vmatprep.subr.bf16.mxu0 0
    %255 = vmatpush1.bf16.msra.mxu0 %v198
    %256 = vmatprep.subr.bf16.mxu0 0
    %257 = vmatpush1.bf16.msra.mxu0 %v197
    %258 = vmatprep.subr.bf16.mxu0 0
    %259 = vmatpush1.bf16.msra.mxu0 %v196
    %260 = vmatprep.subr.bf16.mxu0 0
    %261 = vmatpush1.bf16.msra.mxu0 %v195
    %262 = vmatprep.subr.bf16.mxu0 0
    %263 = vmatpush1.bf16.msra.mxu0 %v194
    %264 = vmatprep.subr.bf16.mxu0 0
    %265 = vmatpush2.bf16.msra.mxu0 %v209
    %266 = vmatprep.subr.bf16.mxu0 0
    %267 = vmatpush2.bf16.msra.mxu0 %v208
    %268 = vmatprep.subr.bf16.mxu0 0
    %269 = vmatpush2.bf16.msra.mxu0 %v207
    %270 = vmatprep.subr.bf16.mxu0 0
    %271 = vmatpush2.bf16.msra.mxu0 %v206
    %272 = vmatprep.subr.bf16.mxu0 0
    %273 = vmatpush2.bf16.msra.mxu0 %v205
    %274 = vmatprep.subr.bf16.mxu0 0
    %275 = vmatpush2.bf16.msra.mxu0 %v204
    %276 = vmatprep.subr.bf16.mxu0 0
    %277 = vmatpush2.bf16.msra.mxu0 %v203
    %278 = vmatprep.subr.bf16.mxu0 0
    %279 = vmatpush2.bf16.msra.mxu0 %v202
    %280 = vmatprep.mubr.bf16.mxu0 %v88
    %281 = vmatmul.mubr.bf16.gmra.mxu0 %v87
    %v282 = vpop.f32.mrf.mxu0
    %v283 = vadd.f32 %v79, %v282
    %v284 = vpop.f32.mrf.mxu0
    %v285 = vpop.f32.mrf.mxu0
    %v286 = vpop.f32.mrf.mxu0
    %287 = vdwg.mxu0
    %288 = vmatprep.subr.bf16.mxu0 0
    %289 = vmatpush1.bf16.msra.mxu0 %v217
    %290 = vmatprep.subr.bf16.mxu0 0
    %291 = vmatpush1.bf16.msra.mxu0 %v216
    %292 = vmatprep.subr.bf16.mxu0 0
    %293 = vmatpush1.bf16.msra.mxu0 %v215
    %294 = vmatprep.subr.bf16.mxu0 0
    %295 = vmatpush1.bf16.msra.mxu0 %v214
    %296 = vmatprep.subr.bf16.mxu0 0
    %297 = vmatpush1.bf16.msra.mxu0 %v213
    %298 = vmatprep.subr.bf16.mxu0 0
    %299 = vmatpush1.bf16.msra.mxu0 %v212
    %300 = vmatprep.subr.bf16.mxu0 0
    %301 = vmatpush1.bf16.msra.mxu0 %v211
    %302 = vmatprep.subr.bf16.mxu0 0
    %303 = vmatpush1.bf16.msra.mxu0 %v210
    %304 = vmatprep.subr.bf16.mxu0 0
    %305 = vmatpush2.bf16.msra.mxu0 0
    %306 = vmatprep.subr.bf16.mxu0 0
    %307 = vmatpush2.bf16.msra.mxu0 0
    %308 = vmatprep.subr.bf16.mxu0 0
    %309 = vmatpush2.bf16.msra.mxu0 0
    %310 = vmatprep.subr.bf16.mxu0 0
    %311 = vmatpush2.bf16.msra.mxu0 0
    %312 = vmatprep.subr.bf16.mxu0 0
    %313 = vmatpush2.bf16.msra.mxu0 0
    %314 = vmatprep.subr.bf16.mxu0 0
    %315 = vmatpush2.bf16.msra.mxu0 0
    %316 = vmatprep.subr.bf16.mxu0 0
    %317 = vmatpush2.bf16.msra.mxu0 0
    %318 = vmatprep.subr.bf16.mxu0 0
    %319 = vmatpush2.bf16.msra.mxu0 %v218
    %320 = vmatprep.mubr.bf16.mxu0 %v246
    %321 = vmatmul.mubr.bf16.gmra.mxu0 %v89
    %v322 = vpop.f32.mrf.mxu0
    %v323 = vadd.f32 %v283, %v322
    %v324 = vpop.f32.mrf.mxu0
    %v325 = vpop.f32.mrf.mxu0
    %v326 = vpop.f32.mrf.mxu0
    %327 = vdwg.mxu0
    %v328 = vmax.f32 %v323, 0.0
    %v329 = vpack.c.bf16 %v328, %v328
    %v330 = vld [vmem:[%s3] sm:$0xf]
    %v331 = vld [vmem:[%s3 + $0x4] sm:$0xf]
    %v332 = vld [vmem:[%s3 + $0x8] sm:$0xf]
    %v333 = vld [vmem:[%s3 + $0xc] sm:$0xf]
    %v334 = vld [vmem:[%s4] sm:$0x1]
    %v336 = vlaneseq
    %v337 = vshrl.u32 %v336, 7
    %v338 = vsub.s32 0, %v337
    %v339 = vrot.slane %v334, %v338
    %v345 = vunpack.c.l.b16 %v330
    %v346 = vunpack.c.l.b16 %v331
    %v347 = vunpack.c.l.b16 %v332
    %v348 = vunpack.c.l.b16 %v333
    %v349 = vpack.c.b16 %v346, %v345
    %v350 = vpack.c.b16 %v348, %v347
    %vm353 = vcmask 261120
    %v355 = vsel %vm353, %v329, 0
    %357 = vmatprep.subr.bf16.mxu0 0
    %358 = vmatpush1.bf16.msra.mxu0 0
    %359 = vmatprep.subr.bf16.mxu0 0
    %360 = vmatpush1.bf16.msra.mxu0 0
    %361 = vmatprep.subr.bf16.mxu0 0
    %362 = vmatpush1.bf16.msra.mxu0 0
    %363 = vmatprep.subr.bf16.mxu0 0
    %364 = vmatpush1.bf16.msra.mxu0 0
    %365 = vmatprep.subr.bf16.mxu0 0
    %366 = vmatpush1.bf16.msra.mxu0 0
    %367 = vmatprep.subr.bf16.mxu0 0
    %368 = vmatpush1.bf16.msra.mxu0 0
    %369 = vmatprep.subr.bf16.mxu0 0
    %370 = vmatpush1.bf16.msra.mxu0 %v350
    %371 = vmatprep.subr.bf16.mxu0 0
    %372 = vmatpush1.bf16.msra.mxu0 %v349
    %373 = vmatprep.subr.bf16.mxu0 0
    %374 = vmatpush2.bf16.msra.mxu0 0
    %375 = vmatprep.subr.bf16.mxu0 0
    %376 = vmatpush2.bf16.msra.mxu0 0
    %377 = vmatprep.subr.bf16.mxu0 0
    %378 = vmatpush2.bf16.msra.mxu0 0
    %379 = vmatprep.subr.bf16.mxu0 0
    %380 = vmatpush2.bf16.msra.mxu0 0
    %381 = vmatprep.subr.bf16.mxu0 0
    %382 = vmatpush2.bf16.msra.mxu0 0
    %383 = vmatprep.subr.bf16.mxu0 0
    %384 = vmatpush2.bf16.msra.mxu0 0
    %385 = vmatprep.subr.bf16.mxu0 0
    %386 = vmatpush2.bf16.msra.mxu0 0
    %387 = vmatprep.subr.bf16.mxu0 0
    %388 = vmatpush2.bf16.msra.mxu0 0
    %389 = vmatprep.mubr.bf16.mxu0 0
    %390 = vmatmul.mubr.bf16.gmra.mxu0 %v355
    %v391 = vpop.f32.mrf.mxu0
    %v392 = vadd.f32 %v339, %v391
    %v393 = vpop.f32.mrf.mxu0
    %v394 = vpop.f32.mrf.mxu0
    %v395 = vpop.f32.mrf.mxu0
    %396 = vdwg.mxu0
    %v397 = vmax.f32 %v392, 0.0
    %398 = vst [vmem:[#allocation2] sm:$0xff] %v397
    // Predicated region
    $region22: #{tpu_custom_call.1} parent=1 // pred_check
      _
    $region23: #{tpu_custom_call.1} parent=1 // pred_check_branch
      %400 = sbr.rel (0) target = $region25
    $region24: #{tpu_custom_call.1} parent=1 // pred_region
      %s402 = ssub.s32 128, 128
      %403 = vsyncadd [#allocation3], %s402
      %s405 = sshll.u32 [#allocation2], 4
      %s406 = int_to_ptr.vmem [resolvable:$true] %s405
      %408 = dma.vmem_to_hbm [thread:$0]  %s406, 128, %s5, [#allocation3]
    $region25: #{tpu_custom_call.1} parent=1 // pred_fallthru
      _
    // Predicated region
    $region26: #{tpu_custom_call.1} parent=1 // pred_check
      _
    $region27: #{tpu_custom_call.1} parent=1 // pred_check_branch
      %410 = sbr.rel (0) target = $region29
    $region28: #{tpu_custom_call.1} parent=1 // pred_region
      %411 = dma.done [#allocation3], 128
    $region29: #{tpu_custom_call.1} parent=1 // pred_fallthru
      _
    %412 = vsyncpa [#allocation3], 1

</llo_original>
